<compile_context>
chip_gen: v6e
topology: v6e:2x2x1
jax: 0.10.0
libtpu: 0.0.40
codegen_flags: <defaults>
</compile_context>

<pallas_src>
import functools
import numpy as np
import jax
import jax.numpy as jnp
from jax.experimental import pallas as pl
from jax.experimental.pallas import tpu as pltpu


# ----------------------------- layout helpers -----------------------------

def _round_up(n, m):
    return ((n + m - 1) // m) * m


def _divisors(n):
    ds = []
    i = 1
    while i * i <= n:
        if n % i == 0:
            ds.append(i)
            if i != n // i:
                ds.append(n // i)
        i += 1
    return sorted(ds)


def _choose_layout(B, F, itemsize, max_block_bytes=2 << 20):
    """Pick (lane width C, padded rows-per-sample Rp, sublane multiple)."""
    sub = max(8, 32 // itemsize)                      # 8 for f32, 16 for bf16, 32 for int8
    Fp = _round_up(max(F, 1), 128)                    # lane-dense feature length
    lane_cap = max(128, (max_block_bytes // (sub * itemsize)) // 128 * 128)
    cands = [128 * d for d in _divisors(Fp // 128) if 128 * d <= lane_cap]
    C = None
    for c in sorted(cands, reverse=True):             # prefer long contiguous lane rows ...
        if (B * (Fp // c)) % sub == 0:                # ... that keep the row count sublane-dense
            C = c
            break
    if C is None:
        C = 128                                       # fallback: maximize rows, pad rows below
    R = Fp // C
    Rp = R if (B * R) % sub == 0 else _round_up(R, sub)
    return C, Rp, sub


def _choose_row_tile(Nrows, C, itemsize, sub, max_block_bytes=2 << 20):
    """Largest sublane-dense divisor of Nrows whose (tr, C) block fits the VMEM budget."""
    cands = [d for d in _divisors(Nrows)
             if d % sub == 0 and d * C * itemsize <= max_block_bytes]
    tr = max(cands) if cands else Nrows
    # Give the two v7x TensorCores independent work when there would be a single grid step;
    # on v5e/v6e this only adds one ~0.35 us step.
    if Nrows // tr == 1 and tr % (2 * sub) == 0:
        tr //= 2
    return tr


# ----------------------------- Pallas kernel -----------------------------

def _drop_path_kernel(x_ref, s_ref, o_ref):
    # s_ref: (tr, 1) float32 per-row scale = keep_mask / keep_prob, broadcast over lanes.
    # Multiply in x's dtype (no f32 upcast of the bulk tensor).
    o_ref[...] = x_ref[...] * s_ref[...].astype(x_ref.dtype)


# ----------------------------- wrapper -----------------------------

def drop_path(x, drop_prob=0.0, training=False, seed=0, key=None):
    """Stochastic depth per sample; mirrors the PyTorch `drop_path` function."""
    if drop_prob is None:
        drop_prob = 0.0
    if drop_prob == 0.0 or not training:
        return x                                      # identity, like the reference
    keep_prob = 1.0 - float(drop_prob)

    B = int(x.shape[0])
    F = int(np.prod(x.shape[1:])) if x.ndim > 1 else 1
    itemsize = jnp.dtype(x.dtype).itemsize

    # Per-sample keep mask (timm): floor(keep_prob + U[0,1)) in {0,1}; fold in 1/keep_prob.
    if key is None:
        key = jax.random.PRNGKey(seed)
    u = jax.random.uniform(key, (B,), jnp.float32)
    scale = jnp.floor(keep_prob + u) * (1.0 / keep_prob)          # (B,) float32

    # Lane-dense, sublane-dense layout: each sample -> Rp rows of C lanes (zero-padded).
    C, Rp, sub = _choose_layout(B, F, itemsize)
    per_sample = Rp * C
    x2 = x.reshape(B, F)
    if per_sample != F:
        x2 = jnp.pad(x2, ((0, 0), (0, per_sample - F)))
    Nrows = B * Rp
    x2 = x2.reshape(Nrows, C)
    scale_rows = jnp.repeat(scale, Rp).reshape(Nrows, 1)          # row -> its sample's scale

    tr = _choose_row_tile(Nrows, C, itemsize, sub)

    out2 = pl.pallas_call(
        _drop_path_kernel,
        out_shape=jax.ShapeDtypeStruct((Nrows, C), x.dtype),
        grid=(Nrows // tr,),
        in_specs=[pl.BlockSpec((tr, C), lambda i: (i, 0)),
                  pl.BlockSpec((tr, 1), lambda i: (i, 0))],
        out_specs=pl.BlockSpec((tr, C), lambda i: (i, 0)),
        compiler_params=pltpu.CompilerParams(
            dimension_semantics=("parallel",),
            vmem_limit_bytes=32 * 1024 * 1024),
    )(x2, scale_rows)

    out = out2.reshape(B, per_sample)[:, :F].reshape(x.shape)
    return out


class DropPath:
    """Drop paths (stochastic depth) per sample — Pallas TPU forward."""

    def __init__(self, drop_prob=None):
        self.drop_prob = drop_prob
        self.training = True

    def __call__(self, x, seed=0):
        return drop_path(x, self.drop_prob, self.training, seed=seed)


# ----------------------------- main -----------------------------

if __name__ == "__main__":
    key = jax.random.PRNGKey(0)
    x = jax.random.normal(key, (2, 4, 16, 16), jnp.float32)       # (B, C, H, W)
    drop_prob = 0.25
    keep_prob = 1.0 - drop_prob

    # ---- training mode: per-sample stochastic depth through the Pallas kernel ----
    fwd = jax.jit(functools.partial(drop_path, drop_prob=drop_prob, training=True, seed=1234))
    out = jax.block_until_ready(fwd(x))
    assert out.shape == x.shape

    xn = np.asarray(x).reshape(x.shape[0], -1)
    on = np.asarray(out).reshape(x.shape[0], -1)
    assert np.all(np.isfinite(on))
    for b in range(x.shape[0]):
        kept = np.allclose(on[b], xn[b] / keep_prob, rtol=1e-5, atol=1e-5)
        dropped = np.allclose(on[b], 0.0)
        assert kept or dropped, "per-sample mask was not applied uniformly across the sample"

    # ---- eval mode / drop_prob == 0: identity, same as the PyTorch reference ----
    module = DropPath(drop_prob)
    module.training = False
    out_eval = module(x)
    assert np.allclose(np.asarray(out_eval), np.asarray(x))

    # ---- larger batch: exercises the multi-sample sublane-dense tile path ----
    x_big = jax.random.normal(jax.random.PRNGKey(1), (16, 8, 32, 32), jnp.float32)
    out_big = jax.block_until_ready(
        jax.jit(functools.partial(drop_path, drop_prob=0.5, training=True, seed=7))(x_big))
    xb = np.asarray(x_big).reshape(16, -1)
    ob = np.asarray(out_big).reshape(16, -1)
    assert np.all(np.isfinite(ob))
    for b in range(16):
        assert (np.allclose(ob[b], xb[b] / 0.5, rtol=1e-5, atol=1e-5)
                or np.allclose(ob[b], 0.0))

    # ---- bf16 + non-128-multiple feature size: exercises pad/crop + native-dtype multiply ----
    x_bf = jax.random.normal(jax.random.PRNGKey(2), (4, 3, 10, 10), jnp.bfloat16)
    out_bf = jax.block_until_ready(
        jax.jit(functools.partial(drop_path, drop_prob=0.25, training=True, seed=3))(x_bf))
    xf = np.asarray(x_bf, np.float32).reshape(4, -1)
    of = np.asarray(out_bf, np.float32).reshape(4, -1)
    assert out_bf.shape == x_bf.shape and np.all(np.isfinite(of))
    for b in range(4):
        assert (np.allclose(of[b], xf[b] / 0.75, rtol=2e-2, atol=2e-2)
                or np.allclose(of[b], 0.0))

    print("KERNEL_OK")
</pallas_src>

<mosaic_0001>
module attributes {stable_mosaic.version = 11 : i64} {
  func.func @_drop_path_kernel(%arg0: i32, %arg1: memref<8x256xf32, #tpu.memory_space<vmem>>, %arg2: memref<8x1xf32, #tpu.memory_space<vmem>>, %arg3: memref<8x256xf32, #tpu.memory_space<vmem>>) attributes {dimension_semantics = [#tpu.dimension_semantics<parallel>], iteration_bounds = array<i64: 1>, scalar_prefetch = 0 : i64, scratch_operands = 0 : i64, tpu.core_type = #tpu.core_type<tc>, window_params = [{transform_indices = @transform_0, window_bounds = array<i64: 8, 256>}, {transform_indices = @transform_1, window_bounds = array<i64: 8, 1>}, {transform_indices = @transform_2, window_bounds = array<i64: 8, 256>}]} {
    %c0 = arith.constant 0 : index
    %c0_0 = arith.constant 0 : index
    %0 = vector.load %arg1[%c0, %c0_0] : memref<8x256xf32, #tpu.memory_space<vmem>>, vector<8x256xf32>
    %c0_1 = arith.constant 0 : index
    %c0_2 = arith.constant 0 : index
    %1 = vector.load %arg2[%c0_1, %c0_2] : memref<8x1xf32, #tpu.memory_space<vmem>>, vector<8x1xf32>
    %2 = vector.broadcast %1 : vector<8x1xf32> to vector<8x256xf32>
    %3 = arith.mulf %0, %2 : vector<8x256xf32>
    %c0_3 = arith.constant 0 : index
    %c0_4 = arith.constant 0 : index
    %4 = vector.load %arg3[%c0_3, %c0_4] : memref<8x256xf32, #tpu.memory_space<vmem>>, vector<8x256xf32>
    tpu.vector_store %arg3[%c0_3, %c0_4], %3 {strides = array<i32>} : memref<8x256xf32, #tpu.memory_space<vmem>>, vector<8x256xf32>,
    return
  }
  func.func @transform_0(%arg0: i32) -> (i32, i32) {
    %c0_i32 = arith.constant 0 : i32
    %c0_i32_0 = arith.constant 0 : i32
    return %arg0, %c0_i32 : i32, i32
  }
  func.func @transform_1(%arg0: i32) -> (i32, i32) {
    %c0_i32 = arith.constant 0 : i32
    %c0_i32_0 = arith.constant 0 : i32
    return %arg0, %c0_i32 : i32, i32
  }
  func.func @transform_2(%arg0: i32) -> (i32, i32) {
    %c0_i32 = arith.constant 0 : i32
    %c0_i32_0 = arith.constant 0 : i32
    return %arg0, %c0_i32 : i32, i32
  }
}

</mosaic_0001>

<llo_original>
// kernel: drop_path.1
$region0: #{drop_path.1}
  #allocation0 [shape = 'u32[]', space=smem, size = 0x4, offset = 0x4, fixed_abs, tag = 'smem constant byte address 0x4 - core index']
  #allocation1 [shape = 'u32[144,128]{1,0:T(1,128)}', space=vmem, size = 0x12000, scoped, tag = 'internal scratch']
  %s0 = inlined_call_operand.vmem [shape: f32[8,256], index: 0, kind: input, shape index: {}]
  %s1 = inlined_call_operand.vmem [shape: f32[8,1], index: 1, kind: input, shape index: {}]
  %s2 = inlined_call_operand.vmem [shape: f32[8,256], index: 2, kind: output, shape index: {}]
  %s3 = sld [smem:[#allocation0]]
  $region18: #{drop_path.1} parent=0
    _
  %s5 = ssub.s32 1, %s3
  %s6 = scalar_select 0, %s5, %s3
  // Predicated region
  $region2: #{drop_path.1} parent=0 // pred_check
    _
  $region3: #{drop_path.1} parent=0 // pred_check_branch
    %8 = sbr.rel (0) target = $region5
  $region4: #{drop_path.1} parent=0 // pred_region
    _
  $region5: #{drop_path.1} parent=0 // pred_fallthru
    _
  // Predicated region
  $region6: #{drop_path.1} parent=0 // pred_check
    _
  $region7: #{drop_path.1} parent=0 // pred_check_branch
    %10 = sbr.rel (0) target = $region9
  $region8: #{drop_path.1} parent=0 // pred_region
    _
  $region9: #{drop_path.1} parent=0 // pred_fallthru
    _
  %v11 = vld [vmem:[%s0] sm:$0xff]
  %v12 = vld [vmem:[%s0 + $0x8] sm:$0xff]
  %v13 = vld [vmem:[%s1] sm:$0xff]
  %15 = vset.pattern.permute.xlu0 0
  %16 = vperm.xlu0 %15, %v13
  %v17 = vpop.permute.xlu0 %16
  %v19 = vmul.f32 %v11, %v17
  %v20 = vmul.f32 %v12, %v17
  %21 = vst [vmem:[%s2] sm:$0xff] %v19
  %22 = vst [vmem:[%s2 + $0x8] sm:$0xff] %v20
  // Predicated region
  $region10: #{drop_path.1} parent=0 // pred_check
    _
  $region11: #{drop_path.1} parent=0 // pred_check_branch
    %24 = sbr.rel (0) target = $region13
  $region12: #{drop_path.1} parent=0 // pred_region
    _
  $region13: #{drop_path.1} parent=0 // pred_fallthru
    _
  // Predicated region
  $region14: #{drop_path.1} parent=0 // pred_check
    _
  $region15: #{drop_path.1} parent=0 // pred_check_branch
    %26 = sbr.rel (0) target = $region17
  $region16: #{drop_path.1} parent=0 // pred_region
    _
  $region17: #{drop_path.1} parent=0 // pred_fallthru
    _

</llo_original>
